<compile_context>
chip_gen: v5e
topology: v5e:2x2
jax: 0.10.0
libtpu: 0.0.40
codegen_flags: <defaults>
</compile_context>

<pallas_src>
import functools
import math

import jax
import jax.numpy as jnp
from jax.experimental import pallas as pl
from jax.experimental.pallas import tpu as pltpu


def _round_up(n, m):
    return ((n + m - 1) // m) * m


# --------------------------------------------------------------------------
# Kernel bodies
# --------------------------------------------------------------------------
def _add_pe(x_ref, pe_ref):
    """x_ref: [seq_tile, B, D] (seq-first) or [seq_tile, D] (batch squeezed);
    pe_ref: [seq_tile, D]. Returns x + pe broadcast over batch."""
    x = x_ref[...]
    pe = pe_ref[...].astype(x.dtype)
    if x.ndim == 3:            # [seq_tile, B, D]: broadcast pe over the batch axis
        pe = pe[:, None, :]
    return x + pe


def _apply_dropout(y, bits, dropout_p):
    # Inverted dropout: keep with prob (1 - p) (off from exact by < 2**-32),
    # scale kept values by 1/(1-p).
    threshold = jnp.uint32(min(int(round(dropout_p * (2.0 ** 32))), 2 ** 32 - 1))
    keep = bits >= threshold
    scale = jnp.asarray(1.0 / (1.0 - dropout_p), y.dtype)
    return jnp.where(keep, y * scale, jnp.zeros_like(y))


def _pe_eval_kernel(x_ref, pe_ref, o_ref):
    o_ref[...] = _add_pe(x_ref, pe_ref).astype(o_ref.dtype)


def _pe_dropout_hw_kernel(seed_ref, x_ref, pe_ref, o_ref, *, dropout_p, grid_ndim):
    # TODO(synk): dropout mask uses the TPU hardware PRNG, so it will not
    # bit-match torch's RNG stream (Bernoulli-keep + 1/(1-p) semantics match).
    y = _add_pe(x_ref, pe_ref)
    # Mix the user seed with the block coordinates so every block draws an
    # independent stream.
    pltpu.prng_seed(seed_ref[0], *(pl.program_id(a) for a in range(grid_ndim)))
    bits = pltpu.prng_random_bits(y.shape)
    if bits.dtype != jnp.uint32:
        bits = pltpu.bitcast(bits, jnp.uint32)
    o_ref[...] = _apply_dropout(y, bits, dropout_p).astype(o_ref.dtype)


def _pe_dropout_bits_kernel(x_ref, pe_ref, bits_ref, o_ref, *, dropout_p):
    # Portable path: random bits supplied as an input (same blocking as x).
    y = _add_pe(x_ref, pe_ref)
    o_ref[...] = _apply_dropout(y, bits_ref[...], dropout_p).astype(o_ref.dtype)


# --------------------------------------------------------------------------
# Sinusoidal table (same values as the PyTorch __init__, stored as 2D [L, D])
# --------------------------------------------------------------------------
def make_sinusoidal_pe(max_seq_len: int, d_model: int, dtype=jnp.float32):
    position = jnp.arange(max_seq_len, dtype=jnp.float32)[:, None]          # [L, 1]
    div_term = jnp.exp(
        jnp.arange(0, d_model, 2, dtype=jnp.float32) * (-math.log(10000.0) / d_model)
    )                                                                        # [D/2]
    pe = jnp.zeros((max_seq_len, d_model), dtype=jnp.float32)
    pe = pe.at[:, 0::2].set(jnp.sin(position * div_term))
    pe = pe.at[:, 1::2].set(jnp.cos(position * div_term))
    return pe.astype(dtype)     # pre-cast to the model dtype at build time


# --------------------------------------------------------------------------
# Wrapper
# --------------------------------------------------------------------------
def _pick_seq_tile(S, vmem_row_bytes):
    """Largest multiple-of-8 divisor of S whose x-block is <= ~1 MiB of VMEM
    (measured ~85% of HBM roofline for tiled elementwise adds)."""
    target_bytes = 1 << 20
    cand = max(1, min(S, target_bytes // max(vmem_row_bytes, 1)))
    divs8 = [d for d in range(8, S + 1, 8) if S % d == 0]
    if not divs8:
        return S                              # tiny / odd S: single full-extent block
    under = [d for d in divs8 if d <= cand]
    return max(under) if under else min(divs8)


def positional_encoder(x, pe, *, dropout_p=0.1, training=False, seed=0,
                       batch_first=False, seq_tile=None):
    """x: [S, B, D] if batch_first=False (torch default) else [B, S, D].
    pe: [L, D] (or the torch-style [L, 1, D] buffer). Returns same layout as x."""
    if pe.ndim == 3:                          # accept the torch [L, 1, D] buffer
        pe = pe.reshape(pe.shape[0], pe.shape[2])

    if batch_first:
        B, S, D = x.shape
    else:
        S, B, D = x.shape
    assert pe.shape[0] >= S and pe.shape[1] == D

    itemsize = jnp.dtype(x.dtype).itemsize
    lanes = _round_up(D, 128)
    if batch_first:
        # kernel block is a dense 2D (seq_tile, D) tile (batch dim squeezed)
        vmem_row_bytes = lanes * itemsize
    else:
        # kernel block is (seq_tile, B, D); trailing (B, D) tile pads to (8,128)
        vmem_row_bytes = _round_up(B, 8) * lanes * itemsize

    if seq_tile is None:
        seq_tile = _pick_seq_tile(S, vmem_row_bytes)
    assert S % seq_tile == 0, "seq length must be divisible by the seq tile"
    assert seq_tile % 8 == 0 or seq_tile == S, "seq_tile must be a multiple of 8"

    # Pass the full pe table and let the index_map select rows (no per-call
    # slice copy) when the tile obeys the (8, 128) rule against the full table;
    # otherwise slice so the pe block spans its full first dim.
    pe_arg = pe if seq_tile % 8 == 0 else pe[:S]

    if batch_first:
        # [B, S, D]: grid (seq slow, batch fast); squeeze the batch dim so each
        # block is a dense 2D (seq_tile, D) tile (seq on sublanes, D on lanes).
        # pe's block index only depends on the slow seq axis, so its DMA is
        # skipped across the fast batch axis.
        grid = (S // seq_tile, B)
        x_spec = pl.BlockSpec((None, seq_tile, D), lambda i, b, *_: (b, i, 0))
        pe_spec = pl.BlockSpec((seq_tile, D), lambda i, b, *_: (i, 0))
    else:
        # [S, B, D]: grid over seq; block (seq_tile, B, D) keeps each HBM read
        # fully contiguous (B*D per sequence row); pe block (seq_tile, D).
        grid = (S // seq_tile,)
        x_spec = pl.BlockSpec((seq_tile, B, D), lambda i, *_: (i, 0, 0))
        pe_spec = pl.BlockSpec((seq_tile, D), lambda i, *_: (i, 0))
    out_spec = x_spec

    apply_dropout = training and dropout_p > 0.0
    on_tpu = jax.default_backend() == "tpu"

    # Raise the scoped-VMEM limit only if the estimated live (layout-padded)
    # blocks exceed the conservative default; cap at v7x's physical 64 MiB.
    x_block_vmem = seq_tile * vmem_row_bytes
    pe_block_vmem = _round_up(seq_tile, 8) * lanes * itemsize
    n_x_streams = 3 if (apply_dropout and not on_tpu) else 2   # x, out (+ bits input)
    est_vmem = 2 * n_x_streams * x_block_vmem + 2 * pe_block_vmem
    if apply_dropout:
        est_vmem += 2 * seq_tile * vmem_row_bytes               # f32/bits temporaries
    vmem_limit = None
    if est_vmem > (16 << 20):
        vmem_limit = min(est_vmem + (8 << 20), 64 << 20)

    compiler_params = pltpu.CompilerParams(
        dimension_semantics=("parallel",) * len(grid),   # lets v7x use both TCs
        vmem_limit_bytes=vmem_limit)
    out_shape = jax.ShapeDtypeStruct(x.shape, x.dtype)

    if not apply_dropout:
        return pl.pallas_call(
            _pe_eval_kernel,
            out_shape=out_shape,
            grid_spec=pltpu.PrefetchScalarGridSpec(
                num_scalar_prefetch=0, grid=grid,
                in_specs=[x_spec, pe_spec], out_specs=out_spec),
            compiler_params=compiler_params,
        )(x, pe_arg)

    if on_tpu:
        # Fast path: in-kernel hardware PRNG, seed prefetched into SMEM.
        kernel = functools.partial(_pe_dropout_hw_kernel,
                                   dropout_p=float(dropout_p),
                                   grid_ndim=len(grid))
        seed_arr = jnp.asarray([seed], dtype=jnp.int32)
        return pl.pallas_call(
            kernel,
            out_shape=out_shape,
            grid_spec=pltpu.PrefetchScalarGridSpec(
                num_scalar_prefetch=1, grid=grid,
                in_specs=[x_spec, pe_spec], out_specs=out_spec),
            compiler_params=compiler_params,
        )(seed_arr, x, pe_arg)

    # Portable path (CPU interpreter / non-TPU): precompute uniform uint32 bits
    # with jax.random and stream them through an extra input blocked like x.
    bits = jax.random.bits(jax.random.PRNGKey(seed), x.shape, dtype=jnp.uint32)
    kernel = functools.partial(_pe_dropout_bits_kernel, dropout_p=float(dropout_p))
    return pl.pallas_call(
        kernel,
        out_shape=out_shape,
        grid_spec=pltpu.PrefetchScalarGridSpec(
            num_scalar_prefetch=0, grid=grid,
            in_specs=[x_spec, pe_spec, x_spec], out_specs=out_spec),
        compiler_params=compiler_params,
    )(x, pe_arg, bits)


# --------------------------------------------------------------------------
# Self-test
# --------------------------------------------------------------------------
if __name__ == "__main__":
    S, B, D = 8, 2, 32
    MAX_SEQ_LEN = 64
    P = 0.1

    key = jax.random.PRNGKey(0)
    kx, kb = jax.random.split(key)
    x = jax.random.normal(kx, (S, B, D), dtype=jnp.float32)     # [seq, batch, d_model]
    pe = make_sinusoidal_pe(MAX_SEQ_LEN, D)

    # Eval mode, batch_first=False (dropout is identity): exact match vs reference.
    y = jax.block_until_ready(positional_encoder(x, pe, dropout_p=P, training=False))
    ref = x + pe[:S][:, None, :]
    assert y.shape == x.shape and y.dtype == x.dtype
    assert jnp.allclose(y, ref, atol=1e-6), "Pallas output mismatch (seq-first)"

    # Eval mode, batch_first=True: kernel indexes [B, S, D] directly, no transposes.
    xb = jax.random.normal(kb, (B, S, D), dtype=jnp.float32)    # [batch, seq, d_model]
    yb = jax.block_until_ready(
        positional_encoder(xb, pe, dropout_p=P, training=False, batch_first=True))
    refb = xb + pe[:S][None, :, :]
    assert yb.shape == xb.shape and yb.dtype == xb.dtype
    assert jnp.allclose(yb, refb, atol=1e-6), "Pallas output mismatch (batch-first)"

    # Training mode (seq-first): every element must be dropped (0) or scaled by 1/(1-p).
    y_tr = jax.block_until_ready(
        positional_encoder(x, pe, dropout_p=P, training=True, seed=1234))
    assert y_tr.shape == x.shape and y_tr.dtype == x.dtype
    scaled = ref / (1.0 - P)
    ok = jnp.isclose(y_tr, 0.0) | jnp.isclose(y_tr, scaled, rtol=1e-5, atol=1e-5)
    assert bool(jnp.all(ok)), "dropout output is neither 0 nor scaled (seq-first)"

    # Training mode (batch-first): exercises the 2-D grid PRNG seeding path.
    yb_tr = jax.block_until_ready(
        positional_encoder(xb, pe, dropout_p=P, training=True, seed=4321,
                           batch_first=True))
    assert yb_tr.shape == xb.shape and yb_tr.dtype == xb.dtype
    scaled_b = refb / (1.0 - P)
    ok_b = jnp.isclose(yb_tr, 0.0) | jnp.isclose(yb_tr, scaled_b, rtol=1e-5, atol=1e-5)
    assert bool(jnp.all(ok_b)), "dropout output is neither 0 nor scaled (batch-first)"

    print("KERNEL_OK")
</pallas_src>

<mosaic_0001>
module attributes {stable_mosaic.version = 11 : i64} {
  func.func @_pe_eval_kernel(%arg0: i32, %arg1: memref<8x2x32xf32, #tpu.memory_space<vmem>>, %arg2: memref<8x32xf32, #tpu.memory_space<vmem>>, %arg3: memref<8x2x32xf32, #tpu.memory_space<vmem>>) attributes {dimension_semantics = [#tpu.dimension_semantics<parallel>], iteration_bounds = array<i64: 1>, scalar_prefetch = 0 : i64, scratch_operands = 0 : i64, tpu.core_type = #tpu.core_type<tc>, window_params = [{transform_indices = @transform_0, window_bounds = array<i64: 8, 2, 32>}, {transform_indices = @transform_1, window_bounds = array<i64: 8, 32>}, {transform_indices = @transform_2, window_bounds = array<i64: 8, 2, 32>}]} {
    %c0 = arith.constant 0 : index
    %c0_0 = arith.constant 0 : index
    %c0_1 = arith.constant 0 : index
    %0 = vector.load %arg1[%c0, %c0_0, %c0_1] : memref<8x2x32xf32, #tpu.memory_space<vmem>>, vector<8x2x32xf32>
    %c0_2 = arith.constant 0 : index
    %c0_3 = arith.constant 0 : index
    %1 = vector.load %arg2[%c0_2, %c0_3] : memref<8x32xf32, #tpu.memory_space<vmem>>, vector<8x32xf32>
    %2 = vector.shape_cast %1 : vector<8x32xf32> to vector<8x1x32xf32>
    %3 = vector.broadcast %2 : vector<8x1x32xf32> to vector<8x2x32xf32>
    %4 = arith.addf %0, %3 : vector<8x2x32xf32>
    %c0_4 = arith.constant 0 : index
    %c0_5 = arith.constant 0 : index
    %c0_6 = arith.constant 0 : index
    %5 = vector.load %arg3[%c0_4, %c0_5, %c0_6] : memref<8x2x32xf32, #tpu.memory_space<vmem>>, vector<8x2x32xf32>
    tpu.vector_store %arg3[%c0_4, %c0_5, %c0_6], %4 {strides = array<i32>} : memref<8x2x32xf32, #tpu.memory_space<vmem>>, vector<8x2x32xf32>,
    return
  }
  func.func @transform_0(%arg0: i32) -> (i32, i32, i32) {
    %c0_i32 = arith.constant 0 : i32
    %c0_i32_0 = arith.constant 0 : i32
    %c0_i32_1 = arith.constant 0 : i32
    return %arg0, %c0_i32, %c0_i32_0 : i32, i32, i32
  }
  func.func @transform_1(%arg0: i32) -> (i32, i32) {
    %c0_i32 = arith.constant 0 : i32
    %c0_i32_0 = arith.constant 0 : i32
    return %arg0, %c0_i32 : i32, i32
  }
  func.func @transform_2(%arg0: i32) -> (i32, i32, i32) {
    %c0_i32 = arith.constant 0 : i32
    %c0_i32_0 = arith.constant 0 : i32
    %c0_i32_1 = arith.constant 0 : i32
    return %arg0, %c0_i32, %c0_i32_0 : i32, i32, i32
  }
}

</mosaic_0001>

<llo_original>
// kernel: tpu_custom_call.1
$region0: #{tpu_custom_call.1}
  #allocation0 [shape = 'u32[]', space=smem, size = 0x4, offset = 0x4, fixed_abs, tag = 'smem constant byte address 0x4 - core index']
  #allocation1 [shape = 'u32[72,128]{1,0:T(1,128)}', space=vmem, size = 0x9000, scoped, tag = 'internal scratch']
  %s0 = inlined_call_operand.vmem [shape: f32[8,2,32], index: 0, kind: input, shape index: {}]
  %s1 = inlined_call_operand.vmem [shape: f32[64,32], index: 1, kind: input, shape index: {}]
  %s2 = inlined_call_operand.hbm [shape: f32[8,2,32], index: 2, kind: output, shape index: {}]
  %s3 = sld [smem:[#allocation0]]
  $region18: #{tpu_custom_call.1} parent=0
    _
  %s5 = ssub.s32 1, %s3
  %s6 = scalar_select 0, %s5, %s3
  $region1: #{tpu_custom_call.1} parent=0
    #allocation2 [shape = 'u8[8192]{0}', space=vmem, size = 0x2000, scoped, tag = 'output window, operand 0, single buffered']
    #allocation3 [shape = 's32[1]{0}', space=sflag, size = 0x4, scoped, tag = 'scoped memory for tpu_custom_call.1']
    %7 = vsyncpa [#allocation3], 0
    // Predicated region
    $region2: #{tpu_custom_call.1} parent=1 // pred_check
      _
    $region3: #{tpu_custom_call.1} parent=1 // pred_check_branch
      %9 = sbr.rel (0) target = $region5
    $region4: #{tpu_custom_call.1} parent=1 // pred_region
      _
    $region5: #{tpu_custom_call.1} parent=1 // pred_fallthru
      _
    // Predicated region
    $region6: #{tpu_custom_call.1} parent=1 // pred_check
      _
    $region7: #{tpu_custom_call.1} parent=1 // pred_check_branch
      %11 = sbr.rel (0) target = $region9
    $region8: #{tpu_custom_call.1} parent=1 // pred_region
      _
    $region9: #{tpu_custom_call.1} parent=1 // pred_fallthru
      _
    %v12 = vld [vmem:[%s0] sm:$0x3]
    %v13 = vld [vmem:[%s0 + $0x2] sm:$0x3]
    %v14 = vld [vmem:[%s0 + $0x4] sm:$0x3]
    %v15 = vld [vmem:[%s0 + $0x6] sm:$0x3]
    %v16 = vld [vmem:[%s0 + $0x8] sm:$0x3]
    %v17 = vld [vmem:[%s0 + $0xa] sm:$0x3]
    %v18 = vld [vmem:[%s0 + $0xc] sm:$0x3]
    %v19 = vld [vmem:[%s0 + $0xe] sm:$0x3]
    %v20 = vld [vmem:[%s1] sm:$0xff]
    %v22 = vrot.slane %v20, 1
    %v23 = vrot.slane %v20, 2
    %v24 = vrot.slane %v20, 3
    %v25 = vrot.slane %v20, 4
    %v26 = vrot.slane %v20, 5
    %v27 = vrot.slane %v20, 6
    %v28 = vrot.slane %v20, 7
    %v29 = vperm.slane %v20, 0
    %v30 = vperm.slane %v22, 0
    %v31 = vperm.slane %v23, 0
    %v32 = vperm.slane %v24, 0
    %v33 = vperm.slane %v25, 0
    %v34 = vperm.slane %v26, 0
    %v35 = vperm.slane %v27, 0
    %v36 = vperm.slane %v28, 0
    %v45 = vadd.f32 %v12, %v29
    %v46 = vadd.f32 %v13, %v30
    %v47 = vadd.f32 %v14, %v31
    %v48 = vadd.f32 %v15, %v32
    %v49 = vadd.f32 %v16, %v33
    %v50 = vadd.f32 %v17, %v34
    %v51 = vadd.f32 %v18, %v35
    %v52 = vadd.f32 %v19, %v36
    %vm53 = vcmask 254976
    %54 = vst.msk [vmem:[#allocation2] sm:$0x3] %vm53, %v45
    %55 = vst.msk [vmem:[#allocation2 + $0x2] sm:$0x3] %vm53, %v46
    %56 = vst.msk [vmem:[#allocation2 + $0x4] sm:$0x3] %vm53, %v47
    %57 = vst.msk [vmem:[#allocation2 + $0x6] sm:$0x3] %vm53, %v48
    %58 = vst.msk [vmem:[#allocation2 + $0x8] sm:$0x3] %vm53, %v49
    %59 = vst.msk [vmem:[#allocation2 + $0xa] sm:$0x3] %vm53, %v50
    %60 = vst.msk [vmem:[#allocation2 + $0xc] sm:$0x3] %vm53, %v51
    %61 = vst.msk [vmem:[#allocation2 + $0xe] sm:$0x3] %vm53, %v52
    // Predicated region
    $region10: #{tpu_custom_call.1} parent=1 // pred_check
      _
    $region11: #{tpu_custom_call.1} parent=1 // pred_check_branch
      %63 = sbr.rel (0) target = $region13
    $region12: #{tpu_custom_call.1} parent=1 // pred_region
      %65 = vsyncadd [#allocation3], 0
      %s66 = sshll.u32 [#allocation2], 4
      %s67 = int_to_ptr.vmem [resolvable:$true] %s66
      %s68 = sshll.u32 %s2, 4
      %s69 = int_to_ptr.hbm [resolvable:$true] %s68
      %74 = dma.vmem_to_hbm [thread:$0]  %s67, 256, %s69, [#allocation3], 32, 32, 2
    $region13: #{tpu_custom_call.1} parent=1 // pred_fallthru
      _
    // Predicated region
    $region14: #{tpu_custom_call.1} parent=1 // pred_check
      _
    $region15: #{tpu_custom_call.1} parent=1 // pred_check_branch
      %76 = sbr.rel (0) target = $region17
    $region16: #{tpu_custom_call.1} parent=1 // pred_region
      %78 = dma.done [#allocation3], 256
    $region17: #{tpu_custom_call.1} parent=1 // pred_fallthru
      _
    %79 = vsyncpa [#allocation3], 1

</llo_original>
